<compile_context>
chip_gen: v7x
topology: tpu7x:2x2x1
jax: 0.10.0
libtpu: 0.0.40
codegen_flags: <defaults>
</compile_context>

<pallas_src>
import functools

import jax
import jax.numpy as jnp
from jax.experimental import pallas as pl
from jax.experimental.pallas import tpu as pltpu


def _layernorm_kernel(alpha_ref, bias_ref, x_ref, o_ref, *, eps):
    # x_ref block: (TILE_ROWS, H) — full hidden dim resident, reduce over last axis.
    x = x_ref[...].astype(jnp.float32)
    h = x.shape[-1]

    # Single-pass reduction: sum and sum of squares.
    s = jnp.sum(x, axis=-1, keepdims=True)
    sq = jnp.sum(x * x, axis=-1, keepdims=True)
    mean = s * (1.0 / h)
    # torch.std default is unbiased (ddof=1):  var = (sumsq - h*mean^2) / (h - 1)
    var = (sq - h * mean * mean) * (1.0 / (h - 1))
    var = jnp.maximum(var, 0.0)  # guard tiny negative from cancellation
    std = jnp.sqrt(var)

    alpha = alpha_ref[0]
    bias = bias_ref[0]

    # Per-row scale: reciprocal on a (TILE_ROWS, 1) column is negligible cost; exact
    # division keeps bit-level parity with the reference.  (pl.reciprocal(...,
    # approx=True) would push it to the EUP slot at ~ulp-scale extra error.)
    inv = 1.0 / (std + eps)
    scale = alpha * inv  # (TILE_ROWS, 1)

    y = (x - mean) * scale + bias  # one mul + add per element
    o_ref[...] = y.astype(o_ref.dtype)


def _pick_tile_rows(rows, h, itemsize):
    """Largest row tile (multiple of 8 / 16) whose double-buffered in+out footprint
    plus f32 working set fits a conservative VMEM budget valid on v5e/v6e/v7x."""
    granule = 8 if itemsize >= 4 else 16  # sublane packing: 16-row granularity for bf16
    vmem_budget = 24 * 1024 * 1024  # bytes; leaves headroom under the 32 MiB scoped limit
    # 2 buffers x (input + output) + ~2x f32 intermediates per row of the tile.
    per_row_bytes = h * (4 * itemsize + 8)
    t = vmem_budget // per_row_bytes
    t = max(granule, (t // granule) * granule)
    t = min(t, 1024)  # diminishing returns past ~1024 rows
    rows_up = pl.cdiv(rows, granule) * granule
    t = min(t, rows_up)
    t = max(granule, (t // granule) * granule)
    return t


def layer_normalization(x, alpha, bias, eps=1e-6, tile_rows=None):
    """x: (..., H). alpha, bias: shape (1,) scalar parameters."""
    orig_shape = x.shape
    h = orig_shape[-1]
    x2d = x.reshape(-1, h)
    rows = x2d.shape[0]
    itemsize = jnp.dtype(x.dtype).itemsize

    if tile_rows is None:
        tile_rows = _pick_tile_rows(rows, h, itemsize)

    # Pad rows to a multiple of tile_rows (padded zero-rows normalize to `bias`, finite).
    padded_rows = pl.cdiv(rows, tile_rows) * tile_rows
    if padded_rows != rows:
        x2d = jnp.pad(x2d, ((0, padded_rows - rows), (0, 0)))

    kernel = functools.partial(_layernorm_kernel, eps=eps)

    # TODO(synk): for H < 128 the output stores are lane-masked (vst.msk); a wrapper-side
    # fold of rows into the lane dim would make them lane-dense, but typical hidden sizes
    # are multiples of 128 so the main path is already lane-dense.
    out = pl.pallas_call(
        kernel,
        out_shape=jax.ShapeDtypeStruct((padded_rows, h), x.dtype),
        grid=(padded_rows // tile_rows,),
        in_specs=[
            pl.BlockSpec(memory_space=pltpu.MemorySpace.SMEM),  # alpha (1,)
            pl.BlockSpec(memory_space=pltpu.MemorySpace.SMEM),  # bias  (1,)
            pl.BlockSpec((tile_rows, h), lambda i: (i, 0)),
        ],
        out_specs=pl.BlockSpec((tile_rows, h), lambda i: (i, 0)),
        compiler_params=pltpu.CompilerParams(
            dimension_semantics=("parallel",),      # lets v7x shard rows over both TCs
            vmem_limit_bytes=32 * 1024 * 1024,      # safe on v5e/v6e/v7x, above defaults
        ),
    )(alpha, bias, x2d)

    if padded_rows != rows:
        out = out[:rows]
    return out.reshape(orig_shape)


def layer_normalization_ref(x, alpha, bias, eps=1e-6):
    xf = x.astype(jnp.float32)
    mean = jnp.mean(xf, axis=-1, keepdims=True)
    std = jnp.std(xf, axis=-1, keepdims=True, ddof=1)  # torch unbiased std
    return (alpha[0] * (xf - mean) / (std + eps) + bias[0]).astype(x.dtype)


if __name__ == "__main__":
    key = jax.random.PRNGKey(0)
    B, S, H = 2, 8, 32
    x = jax.random.normal(key, (B, S, H), dtype=jnp.float32)

    # Deterministic parameter init matching nn.Parameter(torch.ones(1)) / torch.zeros(1)
    alpha = jnp.ones((1,), dtype=jnp.float32)
    bias = jnp.zeros((1,), dtype=jnp.float32)

    out = layer_normalization(x, alpha, bias)
    out = jax.block_until_ready(out)

    ref = layer_normalization_ref(x, alpha, bias)
    assert out.shape == x.shape and out.dtype == x.dtype
    assert jnp.allclose(out, ref, atol=1e-5, rtol=1e-5), "mismatch vs reference"

    # Also exercise a non-divisible row count to check the padded-grid path.
    x_odd = jax.random.normal(jax.random.PRNGKey(1), (3, 7, H), dtype=jnp.float32)
    out_odd = jax.block_until_ready(layer_normalization(x_odd, alpha, bias))
    ref_odd = layer_normalization_ref(x_odd, alpha, bias)
    assert jnp.allclose(out_odd, ref_odd, atol=1e-5, rtol=1e-5), "mismatch (odd rows)"

    print("KERNEL_OK")
</pallas_src>

<mosaic_0001>
module attributes {stable_mosaic.version = 11 : i64} {
  func.func @_layernorm_kernel(%arg0: i32, %arg1: memref<1xf32, #tpu.memory_space<smem>>, %arg2: memref<1xf32, #tpu.memory_space<smem>>, %arg3: memref<16x32xf32, #tpu.memory_space<vmem>>, %arg4: memref<16x32xf32, #tpu.memory_space<vmem>>) attributes {dimension_semantics = [#tpu.dimension_semantics<parallel>], iteration_bounds = array<i64: 1>, scalar_prefetch = 0 : i64, scratch_operands = 0 : i64, tpu.core_type = #tpu.core_type<tc>, window_params = [{transform_indices = @transform_0, window_bounds = array<i64: 1>}, {transform_indices = @transform_1, window_bounds = array<i64: 1>}, {transform_indices = @transform_2, window_bounds = array<i64: 16, 32>}, {transform_indices = @transform_3, window_bounds = array<i64: 16, 32>}]} {
    %c0 = arith.constant 0 : index
    %c0_0 = arith.constant 0 : index
    %0 = vector.load %arg3[%c0, %c0_0] : memref<16x32xf32, #tpu.memory_space<vmem>>, vector<16x32xf32>
    %cst = arith.constant dense<0.000000e+00> : vector<16xf32>
    %1 = vector.multi_reduction <add>, %0, %cst [1] : vector<16x32xf32> to vector<16xf32>
    %2 = vector.shape_cast %1 : vector<16xf32> to vector<16x1xf32>
    %3 = arith.mulf %0, %0 : vector<16x32xf32>
    %cst_1 = arith.constant dense<0.000000e+00> : vector<16xf32>
    %4 = vector.multi_reduction <add>, %3, %cst_1 [1] : vector<16x32xf32> to vector<16xf32>
    %5 = vector.shape_cast %4 : vector<16xf32> to vector<16x1xf32>
    %cst_2 = arith.constant 3.125000e-02 : f32
    %6 = vector.broadcast %cst_2 : f32 to vector<16x1xf32>
    %7 = arith.mulf %2, %6 : vector<16x1xf32>
    %cst_3 = arith.constant 3.200000e+01 : f32
    %8 = vector.broadcast %cst_3 : f32 to vector<16x1xf32>
    %9 = arith.mulf %8, %7 : vector<16x1xf32>
    %10 = arith.mulf %9, %7 : vector<16x1xf32>
    %11 = arith.subf %5, %10 : vector<16x1xf32>
    %cst_4 = arith.constant 0.0322580636 : f32
    %12 = vector.broadcast %cst_4 : f32 to vector<16x1xf32>
    %13 = arith.mulf %11, %12 : vector<16x1xf32>
    %cst_5 = arith.constant 0.000000e+00 : f32
    %14 = vector.broadcast %cst_5 : f32 to vector<16x1xf32>
    %15 = arith.maximumf %13, %14 : vector<16x1xf32>
    %16 = math.sqrt %15 : vector<16x1xf32>
    %c0_6 = arith.constant 0 : index
    %17 = memref.load %arg1[%c0_6] : memref<1xf32, #tpu.memory_space<smem>>
    %c0_7 = arith.constant 0 : index
    %18 = memref.load %arg2[%c0_7] : memref<1xf32, #tpu.memory_space<smem>>
    %cst_8 = arith.constant 9.99999997E-7 : f32
    %19 = vector.broadcast %cst_8 : f32 to vector<16x1xf32>
    %20 = arith.addf %16, %19 : vector<16x1xf32>
    %cst_9 = arith.constant 1.000000e+00 : f32
    %21 = vector.broadcast %cst_9 : f32 to vector<16x1xf32>
    %22 = arith.divf %21, %20 : vector<16x1xf32>
    %23 = vector.broadcast %17 : f32 to vector<16x1xf32>
    %24 = arith.mulf %23, %22 : vector<16x1xf32>
    %25 = vector.broadcast %7 : vector<16x1xf32> to vector<16x32xf32>
    %26 = arith.subf %0, %25 : vector<16x32xf32>
    %27 = vector.broadcast %24 : vector<16x1xf32> to vector<16x32xf32>
    %28 = arith.mulf %26, %27 : vector<16x32xf32>
    %29 = vector.broadcast %18 : f32 to vector<16x32xf32>
    %30 = arith.addf %28, %29 : vector<16x32xf32>
    %c0_10 = arith.constant 0 : index
    %c0_11 = arith.constant 0 : index
    %31 = vector.load %arg4[%c0_10, %c0_11] : memref<16x32xf32, #tpu.memory_space<vmem>>, vector<16x32xf32>
    tpu.vector_store %arg4[%c0_10, %c0_11], %30 {strides = array<i32>} : memref<16x32xf32, #tpu.memory_space<vmem>>, vector<16x32xf32>,
    return
  }
  func.func @transform_0(%arg0: i32) -> i32 {
    %c0_i32 = arith.constant 0 : i32
    %c0_i32_0 = arith.constant 0 : i32
    return %c0_i32 : i32
  }
  func.func @transform_1(%arg0: i32) -> i32 {
    %c0_i32 = arith.constant 0 : i32
    %c0_i32_0 = arith.constant 0 : i32
    return %c0_i32 : i32
  }
  func.func @transform_2(%arg0: i32) -> (i32, i32) {
    %c0_i32 = arith.constant 0 : i32
    %c0_i32_0 = arith.constant 0 : i32
    return %arg0, %c0_i32 : i32, i32
  }
  func.func @transform_3(%arg0: i32) -> (i32, i32) {
    %c0_i32 = arith.constant 0 : i32
    %c0_i32_0 = arith.constant 0 : i32
    return %arg0, %c0_i32 : i32, i32
  }
}

</mosaic_0001>

<llo_original>
// kernel: tpu_custom_call.1
$region0: #{tpu_custom_call.1}
  #allocation0 [shape = 'u32[]', space=smem, size = 0x4, offset = 0x4, fixed_abs, tag = 'smem constant byte address 0x4 - core index']
  #allocation1 [shape = 'u32[144,128]{1,0:T(1,128)}', space=vmem, size = 0x12000, scoped, tag = 'internal scratch']
  #allocation2 [shape = 'f32[1]{0:T(128)S(6)}', space=smem, size = 0x200, scoped, tag = 'scoped memory for tpu_custom_call.1']
  #allocation3 [shape = 'f32[1]{0:T(128)S(6)}', space=smem, size = 0x200, scoped, tag = 'scoped memory for tpu_custom_call.1']
  %s0 = inlined_call_operand.<no memory space> [shape: f32[1], index: 0, kind: input, shape index: {}]
  %s1 = inlined_call_operand.<no memory space> [shape: f32[1], index: 1, kind: input, shape index: {}]
  %s2 = inlined_call_operand.hbm [shape: f32[16,32], index: 2, kind: input, shape index: {}]
  %s3 = inlined_call_operand.hbm [shape: f32[16,32], index: 3, kind: output, shape index: {}]
  %s4 = sld [smem:[#allocation0]]
  $region26: #{tpu_custom_call.1} parent=0
    _
  %s6 = ssub.s32 1, %s4
  %s7 = scalar_select 0, %s6, %s4
  %8 = sst [smem:[#allocation2]] %s0
  %9 = sst [smem:[#allocation3]] %s1
  $region1: #{tpu_custom_call.1} parent=0
    #allocation4 [shape = 'u8[8192]{0}', space=vmem, size = 0x2000, scoped, tag = 'input window, operand 2, single buffered']
    #allocation5 [shape = 's32[1]{0}', space=sflag, size = 0x4, scoped, tag = 'scoped memory for tpu_custom_call.1']
    #allocation6 [shape = 's32[1]{0}', space=sflag, size = 0x4, scoped, tag = 'scoped memory for tpu_custom_call.1']
    #allocation7 [shape = 'u8[8192]{0}', space=vmem, size = 0x2000, scoped, tag = 'output window, operand 0, single buffered']
    %10 = vsyncpa [#allocation5], 0
    %11 = vsyncpa [#allocation6], 0
    // Predicated region
    $region2: #{tpu_custom_call.1} parent=1 // pred_check
      _
    $region3: #{tpu_custom_call.1} parent=1 // pred_check_branch
      %13 = sbr.rel (0) target = $region5
    $region4: #{tpu_custom_call.1} parent=1 // pred_region
      _
    $region5: #{tpu_custom_call.1} parent=1 // pred_fallthru
      _
    // Predicated region
    $region6: #{tpu_custom_call.1} parent=1 // pred_check
      _
    $region7: #{tpu_custom_call.1} parent=1 // pred_check_branch
      %15 = sbr.rel (0) target = $region9
    $region8: #{tpu_custom_call.1} parent=1 // pred_region
      _
    $region9: #{tpu_custom_call.1} parent=1 // pred_fallthru
      _
    // Predicated region
    $region10: #{tpu_custom_call.1} parent=1 // pred_check
      _
    $region11: #{tpu_custom_call.1} parent=1 // pred_check_branch
      %17 = sbr.rel (0) target = $region13
    $region12: #{tpu_custom_call.1} parent=1 // pred_region
      %s19 = ssub.s32 256, 256
      %20 = vsyncadd [#allocation5], %s19
      %s21 = sshll.u32 [#allocation4], 4
      %s22 = int_to_ptr.vmem [resolvable:$true] %s21
      %27 = dma.hbm_to_vmem [thread:$0]  %s2, 256, %s22, [#allocation5], 128, 128, 8
    $region13: #{tpu_custom_call.1} parent=1 // pred_fallthru
      _
    // Predicated region
    $region14: #{tpu_custom_call.1} parent=1 // pred_check
      _
    $region15: #{tpu_custom_call.1} parent=1 // pred_check_branch
      %29 = sbr.rel (0) target = $region17
    $region16: #{tpu_custom_call.1} parent=1 // pred_region
      %30 = dma.done [#allocation5], 256
    $region17: #{tpu_custom_call.1} parent=1 // pred_fallthru
      _
    %v31 = vld [vmem:[#allocation4] sm:$0xff]
    %v32 = vld [vmem:[#allocation4 + $0x8] sm:$0xff]
    %vm33 = vcmask 261120
    %v34 = vsel %vm33, %v31, 0.0
    %35 = vadd.xlane.f32.xlu0 %v34
    %v36 = vpop.xlane.xlu0 %35
    %v37 = vsel %vm33, %v32, 0.0
    %38 = vadd.xlane.f32.xlu0 %v37
    %v39 = vpop.xlane.xlu0 %38
    %v40 = vmul.f32 %v31, %v31
    %v41 = vmul.f32 %v32, %v32
    %v42 = vsel %vm33, %v40, 0.0
    %43 = vadd.xlane.f32.xlu0 %v42
    %v44 = vpop.xlane.xlu0 %43
    %v45 = vsel %vm33, %v41, 0.0
    %46 = vadd.xlane.f32.xlu0 %v45
    %v47 = vpop.xlane.xlu0 %46
    %v48 = vmul.f32 %v36, 0.03125
    %v49 = vmul.f32 %v39, 0.03125
    %v50 = vmul.f32 %v48, 32.0
    %v51 = vmul.f32 %v49, 32.0
    %v52 = vmul.f32 %v50, %v48
    %v53 = vmul.f32 %v51, %v49
    %v54 = vsub.f32 %v44, %v52
    %v55 = vsub.f32 %v47, %v53
    %v56 = vmul.f32 %v54, 0.032258064
    %v57 = vmul.f32 %v55, 0.032258064
    %v58 = vmax.f32 %v56, 0.0
    %v59 = vmax.f32 %v57, 0.0
    %v60 = vrsqrt.pop %v58
    %v61 = vmul.f32 %v58, %v60
    %vm62 = vcmp.eq.f32.partialorder %v58, inf
    %v63 = vsel %vm62, %v58, %v61
    %vm64 = vcmp.eq.f32.partialorder %v58, 0.0
    %v65 = vand.u32 %v58, 2147483648
    %v66 = vsel %vm64, %v65, %v63
    %v67 = vrsqrt.pop %v59
    %v68 = vmul.f32 %v59, %v67
    %vm69 = vcmp.eq.f32.partialorder %v59, inf
    %v70 = vsel %vm69, %v59, %v68
    %vm71 = vcmp.eq.f32.partialorder %v59, 0.0
    %v72 = vand.u32 %v59, 2147483648
    %v73 = vsel %vm71, %v72, %v70
    %s74 = sld [smem:[#allocation2]]
    %s75 = sld [smem:[#allocation3]]
    %v76 = vadd.f32 %v66, 1e-06
    %v77 = vadd.f32 %v73, 1e-06
    %v78 = vrcp.pop %v76
    %v79 = vmul.f32 1.0, %v78
    %v80 = vrcp.pop %v77
    %v81 = vmul.f32 1.0, %v80
    %v82 = vstv %s74
    %v83 = vmul.f32 %v82, %v79
    %v84 = vmul.f32 %v82, %v81
    %v85 = vsub.f32 %v31, %v48
    %v86 = vsub.f32 %v32, %v49
    %v87 = vmul.f32 %v85, %v83
    %v88 = vmul.f32 %v86, %v84
    %v89 = vstv %s75
    %v90 = vadd.f32 %v87, %v89
    %v91 = vadd.f32 %v88, %v89
    %92 = vst.msk [vmem:[#allocation7] sm:$0xff] %vm33, %v90
    %93 = vst.msk [vmem:[#allocation7 + $0x8] sm:$0xff] %vm33, %v91
    // Predicated region
    $region18: #{tpu_custom_call.1} parent=1 // pred_check
      _
    $region19: #{tpu_custom_call.1} parent=1 // pred_check_branch
      %95 = sbr.rel (0) target = $region21
    $region20: #{tpu_custom_call.1} parent=1 // pred_region
      %s97 = ssub.s32 256, 256
      %98 = vsyncadd [#allocation6], %s97
      %s99 = sshll.u32 [#allocation7], 4
      %s100 = int_to_ptr.vmem [resolvable:$true] %s99
      %105 = dma.vmem_to_hbm [thread:$0]  %s100, 256, %s3, [#allocation6], 128, 128, 8
    $region21: #{tpu_custom_call.1} parent=1 // pred_fallthru
      _
    // Predicated region
    $region22: #{tpu_custom_call.1} parent=1 // pred_check
      _
    $region23: #{tpu_custom_call.1} parent=1 // pred_check_branch
      %107 = sbr.rel (0) target = $region25
    $region24: #{tpu_custom_call.1} parent=1 // pred_region
      %108 = dma.done [#allocation6], 256
    $region25: #{tpu_custom_call.1} parent=1 // pred_fallthru
      _
    %109 = vsyncpa [#allocation5], 1
    %110 = vsyncpa [#allocation6], 1

</llo_original>
